<compile_context>
chip_gen: v5e
topology: v5e:2x2
jax: 0.10.0
libtpu: 0.0.40
codegen_flags: <defaults>
</compile_context>

<pallas_src>
import jax
import jax.numpy as jnp
from jax.experimental import pallas as pl
from jax.experimental.pallas import tpu as pltpu


def encoder_cnn_forward(images, params, *, thw=None):
    """images: (B, Cin, H, W) float32 NCHW, like the PyTorch module."""
    B, Cin, H, W = images.shape
    HW = H * W
    Cfeat = params["w_stem_t"].shape[0]
    E = params["b_embed"].shape[1]

    if thw is None:
        thw = min(HW, 2048)           # large tiles: amortize per-step pipeline cost
    assert HW % thw == 0, "spatial tile must divide H*W"
    assert thw % 128 == 0, "spatial tile must be lane-aligned (multiple of 128)"
    assert Cfeat % 128 == 0 and E % 128 == 0, "keep lane dims 128-aligned"

    inv_hw = 1.0 / float(HW)          # host constant; no approx reciprocal in-kernel
    n_lane_tiles = thw // 128

    # NCHW -> (B, Cin, HW): a FREE reshape (no transpose / HBM shuffle).
    # bf16 halves x DMA bytes and is the native MXU input dtype.
    x = images.reshape(B, Cin, HW).astype(jnp.bfloat16)

    # -------------- kernel 1: stem (1x1 conv + ReLU) + global average pool ----
    def stem_pool_kernel(x_ref, ws_ref, bs_ref, o_ref, acc_ref):
        t = pl.program_id(1)

        @pl.when(t == 0)
        def _():
            acc_ref[...] = jnp.zeros_like(acc_ref)

        xt = x_ref[0]                                           # (Cin, thw) bf16
        # Stem: channel projection + ReLU, bf16 x bf16 -> f32 accumulate.
        h = jnp.dot(ws_ref[...], xt, preferred_element_type=jnp.float32)
        h = jnp.maximum(h + bs_ref[...], 0.0)                   # (Cfeat, thw) f32

        # Pool partials: 128-lane-aligned chunk adds (pure VALU, full-vreg
        # accumulator read-modify-write).  The single cross-lane (XLU) reduce
        # happens once per batch in the t == last branch.
        part = h[:, 0:128]
        for g in range(1, n_lane_tiles):
            part = part + h[:, g * 128:(g + 1) * 128]
        acc_ref[...] += part                                    # (Cfeat, 128) f32

        @pl.when(t == pl.num_programs(1) - 1)
        def _():
            pooled = jnp.sum(acc_ref[...], axis=1, keepdims=True) * inv_hw
            o_ref[...] = pooled[None]                           # (1, Cfeat, 1)

    pooled3 = pl.pallas_call(
        stem_pool_kernel,
        out_shape=jax.ShapeDtypeStruct((B, Cfeat, 1), jnp.float32),
        grid_spec=pltpu.PrefetchScalarGridSpec(
            num_scalar_prefetch=0,
            grid=(B, HW // thw),              # batch outer, reduction axis last
            in_specs=[
                # Lane-dense x tile (HW on lanes), pipelined over the reduction.
                pl.BlockSpec((1, Cin, thw), lambda b, t: (b, 0, t)),
                # Tiny stem weights / bias stay resident (constant index maps).
                pl.BlockSpec((Cfeat, Cin), lambda b, t: (0, 0)),
                pl.BlockSpec((Cfeat, 1), lambda b, t: (0, 0)),
            ],
            # Same output block across the reduction axis (accumulator pattern).
            out_specs=pl.BlockSpec((1, Cfeat, 1), lambda b, t: (b, 0, 0)),
            scratch_shapes=[pltpu.VMEM((Cfeat, 128), jnp.float32)],
        ),
        compiler_params=pltpu.CompilerParams(
            dimension_semantics=("parallel", "arbitrary"),  # megacore on batch
            vmem_limit_bytes=48 * 1024 * 1024,              # headroom under v7x 64 MiB
        ),
    )(x, params["w_stem_t"], params["b_stem"])

    pooled = pooled3.reshape(B, Cfeat)        # drop trailing 1-dim (free)

    # -------------- kernel 2: embed Linear (split out of the fused kernel) ----
    # Full-array single-block call: keeps the (Cfeat, E) weight out of the
    # pooling kernel's VMEM budget and gives the MXU an M = B matmul.
    def embed_kernel(p_ref, we_ref, be_ref, o_ref):
        p = p_ref[...].astype(jnp.bfloat16)
        out = jnp.dot(p, we_ref[...], preferred_element_type=jnp.float32)
        o_ref[...] = (out + be_ref[...]).astype(o_ref.dtype)

    out = pl.pallas_call(
        embed_kernel,
        out_shape=jax.ShapeDtypeStruct((B, E), jnp.float32),
    )(pooled, params["w_embed_t"], params["b_embed"])

    return out


def init_params(key, cin, cfeat, embed_size):
    k1, k2, k3, k4 = jax.random.split(key, 4)
    w_stem = jax.random.normal(k1, (cin, cfeat), jnp.float32) * 0.1
    # nn.Linear(resnet.fc.in_features, embed_size): PyTorch weight is (E, Cfeat).
    # Transpose ONCE at init (no per-forward transpose) and store bf16 for MXU.
    w_embed = jax.random.normal(k3, (embed_size, cfeat), jnp.float32) * 0.05
    return {
        "w_stem_t": jnp.transpose(w_stem).astype(jnp.bfloat16),    # (Cfeat, Cin)
        "b_stem": jax.random.normal(k2, (cfeat, 1), jnp.float32) * 0.1,
        "w_embed_t": jnp.transpose(w_embed).astype(jnp.bfloat16),  # (Cfeat, E)
        "b_embed": jax.random.normal(k4, (1, embed_size), jnp.float32) * 0.1,
    }


if __name__ == "__main__":
    key = jax.random.PRNGKey(0)
    k_img, k_par = jax.random.split(key)

    # Small stand-in for (B, 3, 224, 224); B even so both v7x cores get work.
    B, Cin, H, W = 2, 4, 16, 16
    Cfeat = 256            # stand-in for resnet.fc.in_features = 2048
    embed_size = 128       # lane-aligned embed dim

    images = jax.random.normal(k_img, (B, Cin, H, W), jnp.float32)
    params = init_params(k_par, Cin, Cfeat, embed_size)

    # thw=128 -> 2 reduction steps per batch (exercises accumulator + pipeline).
    features = encoder_cnn_forward(images, params, thw=128)
    features = jax.block_until_ready(features)

    # Plain-JAX reference of the same graph (same bf16 rounding of x / weights).
    xb = images.reshape(B, Cin, H * W).astype(jnp.bfloat16).astype(jnp.float32)
    ws = params["w_stem_t"].astype(jnp.float32)            # (Cfeat, Cin)
    h_ref = jnp.einsum("fc,bcs->bfs", ws, xb,
                       precision=jax.lax.Precision.HIGHEST)
    h_ref = jnp.maximum(h_ref + params["b_stem"][None], 0.0)
    pooled_ref = h_ref.mean(axis=2)                         # (B, Cfeat)
    we = params["w_embed_t"].astype(jnp.float32)            # (Cfeat, E)
    out_ref = jnp.dot(pooled_ref.astype(jnp.bfloat16).astype(jnp.float32), we,
                      precision=jax.lax.Precision.HIGHEST) + params["b_embed"]

    assert features.shape == (B, embed_size)
    assert jnp.allclose(features, out_ref, atol=1e-2, rtol=1e-2), (
        float(jnp.max(jnp.abs(features - out_ref))))

    print("KERNEL_OK")
</pallas_src>

<mosaic_0001>
module attributes {stable_mosaic.version = 11 : i64} {
  func.func @stem_pool_kernel(%arg0: i32, %arg1: i32, %arg2: memref<1x4x128xbf16, #tpu.memory_space<vmem>>, %arg3: memref<256x4xbf16, #tpu.memory_space<vmem>>, %arg4: memref<256x1xf32, #tpu.memory_space<vmem>>, %arg5: memref<1x256x1xf32, #tpu.memory_space<vmem>>, %arg6: memref<256x128xf32, #tpu.memory_space<vmem>>) attributes {dimension_semantics = [#tpu.dimension_semantics<parallel>, #tpu.dimension_semantics<arbitrary>], iteration_bounds = array<i64: 2, 2>, scalar_prefetch = 0 : i64, scratch_operands = 1 : i64, tpu.core_type = #tpu.core_type<tc>, window_params = [{transform_indices = @transform_0, window_bounds = array<i64: 1, 4, 128>}, {pipeline_mode = #tpu.pipeline_mode<synchronous>, transform_indices = @transform_1, window_bounds = array<i64: 256, 4>}, {pipeline_mode = #tpu.pipeline_mode<synchronous>, transform_indices = @transform_2, window_bounds = array<i64: 256, 1>}, {transform_indices = @transform_3, window_bounds = array<i64: 1, 256, 1>}]} {
    %c0_i32 = arith.constant 0 : i32
    %0 = arith.cmpi eq, %arg1, %c0_i32 : i32
    %1 = arith.extui %0 : i1 to i32
    %c0_i32_0 = arith.constant 0 : i32
    %2 = arith.cmpi ne, %1, %c0_i32_0 : i32
    scf.if %2 {
      %cst_13 = arith.constant 0.000000e+00 : f32
      %18 = vector.broadcast %cst_13 : f32 to vector<256x128xf32>
      %c0_14 = arith.constant 0 : index
      %c0_15 = arith.constant 0 : index
      %19 = vector.load %arg6[%c0_14, %c0_15] : memref<256x128xf32, #tpu.memory_space<vmem>>, vector<256x128xf32>
      tpu.vector_store %arg6[%c0_14, %c0_15], %18 {strides = array<i32>} : memref<256x128xf32, #tpu.memory_space<vmem>>, vector<256x128xf32>,
    } else {
    }
    %c0 = arith.constant 0 : index
    %c0_1 = arith.constant 0 : index
    %c0_2 = arith.constant 0 : index
    %3 = vector.load %arg2[%c0, %c0_1, %c0_2] : memref<1x4x128xbf16, #tpu.memory_space<vmem>>, vector<1x4x128xbf16>
    %4 = vector.shape_cast %3 : vector<1x4x128xbf16> to vector<4x128xbf16>
    %c0_3 = arith.constant 0 : index
    %c0_4 = arith.constant 0 : index
    %5 = vector.load %arg3[%c0_3, %c0_4] : memref<256x4xbf16, #tpu.memory_space<vmem>>, vector<256x4xbf16>
    %cst = arith.constant dense<0.000000e+00> : vector<256x128xf32>
    %6 = tpu.matmul %5, %4, %cst {dimension_numbers = #tpu.dot_dimension_numbers<[1], [0], [0], [1], [0, 0, 1, 1], [], []>} : vector<256x4xbf16>, vector<4x128xbf16>, vector<256x128xf32> -> vector<256x128xf32>
    %c0_5 = arith.constant 0 : index
    %c0_6 = arith.constant 0 : index
    %7 = vector.load %arg4[%c0_5, %c0_6] : memref<256x1xf32, #tpu.memory_space<vmem>>, vector<256x1xf32>
    %8 = vector.broadcast %7 : vector<256x1xf32> to vector<256x128xf32>
    %9 = arith.addf %6, %8 : vector<256x128xf32>
    %cst_7 = arith.constant 0.000000e+00 : f32
    %10 = vector.broadcast %cst_7 : f32 to vector<256x128xf32>
    %11 = arith.maximumf %9, %10 : vector<256x128xf32>
    %c0_8 = arith.constant 0 : index
    %c0_9 = arith.constant 0 : index
    %12 = vector.load %arg6[%c0_8, %c0_9] : memref<256x128xf32, #tpu.memory_space<vmem>>, vector<256x128xf32>
    %13 = arith.addf %12, %11 : vector<256x128xf32>
    %c0_10 = arith.constant 0 : index
    %c0_11 = arith.constant 0 : index
    %14 = vector.load %arg6[%c0_10, %c0_11] : memref<256x128xf32, #tpu.memory_space<vmem>>, vector<256x128xf32>
    tpu.vector_store %arg6[%c0_10, %c0_11], %13 {strides = array<i32>} : memref<256x128xf32, #tpu.memory_space<vmem>>, vector<256x128xf32>,
    %c1_i32 = arith.constant 1 : i32
    %15 = arith.cmpi eq, %arg1, %c1_i32 : i32
    %16 = arith.extui %15 : i1 to i32
    %c0_i32_12 = arith.constant 0 : i32
    %17 = arith.cmpi ne, %16, %c0_i32_12 : i32
    scf.if %17 {
      %c0_13 = arith.constant 0 : index
      %c0_14 = arith.constant 0 : index
      %18 = vector.load %arg6[%c0_13, %c0_14] : memref<256x128xf32, #tpu.memory_space<vmem>>, vector<256x128xf32>
      %cst_15 = arith.constant dense<0.000000e+00> : vector<256xf32>
      %19 = vector.multi_reduction <add>, %18, %cst_15 [1] : vector<256x128xf32> to vector<256xf32>
      %20 = vector.shape_cast %19 : vector<256xf32> to vector<256x1xf32>
      %cst_16 = arith.constant 3.906250e-03 : f32
      %21 = vector.broadcast %cst_16 : f32 to vector<256x1xf32>
      %22 = arith.mulf %20, %21 : vector<256x1xf32>
      %23 = vector.shape_cast %22 : vector<256x1xf32> to vector<1x256x1xf32>
      %c0_17 = arith.constant 0 : index
      %c0_18 = arith.constant 0 : index
      %c0_19 = arith.constant 0 : index
      %24 = vector.load %arg5[%c0_17, %c0_18, %c0_19] : memref<1x256x1xf32, #tpu.memory_space<vmem>>, vector<1x256x1xf32>
      tpu.vector_store %arg5[%c0_17, %c0_18, %c0_19], %23 {strides = array<i32>} : memref<1x256x1xf32, #tpu.memory_space<vmem>>, vector<1x256x1xf32>,
    } else {
    }
    return
  }
  func.func @transform_0(%arg0: i32, %arg1: i32) -> (i32, i32, i32) {
    %c0_i32 = arith.constant 0 : i32
    %c0_i32_0 = arith.constant 0 : i32
    return %arg0, %c0_i32, %arg1 : i32, i32, i32
  }
  func.func @transform_1(%arg0: i32, %arg1: i32) -> (i32, i32) {
    %c0_i32 = arith.constant 0 : i32
    %c0_i32_0 = arith.constant 0 : i32
    %c0_i32_1 = arith.constant 0 : i32
    return %c0_i32, %c0_i32_0 : i32, i32
  }
  func.func @transform_2(%arg0: i32, %arg1: i32) -> (i32, i32) {
    %c0_i32 = arith.constant 0 : i32
    %c0_i32_0 = arith.constant 0 : i32
    %c0_i32_1 = arith.constant 0 : i32
    return %c0_i32, %c0_i32_0 : i32, i32
  }
  func.func @transform_3(%arg0: i32, %arg1: i32) -> (i32, i32, i32) {
    %c0_i32 = arith.constant 0 : i32
    %c0_i32_0 = arith.constant 0 : i32
    %c0_i32_1 = arith.constant 0 : i32
    return %arg0, %c0_i32, %c0_i32_0 : i32, i32, i32
  }
}

</mosaic_0001>

<llo_original>
// kernel: tpu_custom_call.1
$region0: #{tpu_custom_call.1}
  #allocation0 [shape = 'u32[]', space=smem, size = 0x4, offset = 0x4, fixed_abs, tag = 'smem constant byte address 0x4 - core index']
  #allocation1 [shape = 'u32[72,128]{1,0:T(1,128)}', space=vmem, size = 0x9000, scoped, tag = 'internal scratch']
  #allocation2 [shape = 'f32[256,128]{1,0:T(8,128)}', space=vmem, size = 0x20000, scoped, tag = 'scratch operand']
  %s0 = inlined_call_operand.vmem [shape: bf16[2,4,256], index: 0, kind: input, shape index: {}]
  %s1 = inlined_call_operand.vmem [shape: bf16[256,4], index: 1, kind: input, shape index: {}]
  %s2 = inlined_call_operand.vmem [shape: f32[256,1], index: 2, kind: input, shape index: {}]
  %s3 = inlined_call_operand.vmem [shape: f32[2,256,1], index: 3, kind: output, shape index: {}]
  %s4 = sld [smem:[#allocation0]]
  $region53: #{tpu_custom_call.1} parent=0
    _
  %s6 = ssub.s32 1, %s4
  %s7 = scalar_select 0, %s6, %s4
  loop: start=0, step=1, limit=6
  $region2: #{tpu_custom_call.1} parent=0 // loop_pre_header
    _
  $region3: #{tpu_custom_call.1} parent=0 // loop_header
    %s9 = sphi 0, %s13
    %p10 = scmp.ge.s32.totalorder %s9, 6
    %s16 = sphi 0, %s28
    %s17 = sphi 0, %s24
    %s18 = sphi 0, %s16
    %s19 = sphi 0, %s17
    %s20 = sphi 0, %s18
    %s21 = sphi 0, %s19
    %s33 = sphi 0, %s35
    %s36 = sphi 0, %s33
    %s37 = sphi 0, %s36
    %s53 = sphi 0, %s37
    %s57 = sphi 0, %s57
    %s59 = sphi 0, %s57
    %s60 = sphi 0, %s59
    %s74 = sphi 0, %s60
    %s78 = sphi 0, %s78
    %s80 = sphi 0, %s78
    %s81 = sphi 0, %s80
    %s95 = sphi 0, %s81
    %s101 = sphi 0, %s103
    %s104 = sphi 0, %s101
    %s105 = sphi 0, %s104
    %s121 = sphi 0, %s105
  $region4: #{tpu_custom_call.1} parent=0 // loop_header_branch
    %12 = sbr.rel (%p10) target = $region8
  $region5: #{tpu_custom_call.1} parent=0 // loop_body
    %s14 = ssub.s32 %s9, 1
    %s15 = ssub.s32 %s9, 2
    %s22 = sadd.s32 1, %s17
    %p23 = scmp.ge.s32.totalorder %s22, 2
    %s24 = scalar_select %p23, 0, %s22
    %s25 = sadd.s32 1, %s16
    %s26 = scalar_select %p23, %s25, %s16
    %p27 = scmp.ge.s32.totalorder %s26, 2
    %s28 = scalar_select %p27, 0, %s26
    %s29 = ssub.s32 %s16, %s28
    %s30 = ssub.s32 %s17, %s24
    %s31 = sor.u32 %s29, %s30
    %p32 = scmp.eq.s32.totalorder %s31, 0
    %s34 = sadd.s32 %s33, 1
    %s35 = scalar_select %p32, %s33, %s34
    %p38 = pneg %p32
    %p39 = scmp.eq.s32.totalorder %s9, 3
    %p40 = por %p38, %p39
    %p41 = scmp.ne.s32.totalorder %s33, %s36
    %p42 = scmp.eq.s32.totalorder %s9, 0
    %p43 = por %p41, %p42
    %p44 = scmp.ne.s32.totalorder %s33, %s36
    %p45 = scmp.eq.s32.totalorder %s14, 3
    %p46 = por %p44, %p45
    %p47 = scmp.ne.s32.totalorder %s36, %s37
    %p48 = scmp.eq.s32.totalorder %s14, 0
    %p49 = por %p47, %p48
    %p50 = scmp.ne.s32.totalorder %s36, %s37
    %p51 = scmp.eq.s32.totalorder %s15, 3
    %p52 = por %p50, %p51
    %p54 = scmp.ne.s32.totalorder %s37, %s53
    %p55 = scmp.eq.s32.totalorder %s15, 0
    %p56 = por %p54, %p55
    %s58 = sadd.s32 %s57, 1
    %p61 = scmp.eq.s32.totalorder %s9, 3
    %p62 = scmp.ne.s32.totalorder %s57, %s59
    %p63 = scmp.eq.s32.totalorder %s9, 0
    %p64 = por %p62, %p63
    %p65 = scmp.ne.s32.totalorder %s57, %s59
    %p66 = scmp.eq.s32.totalorder %s14, 3
    %p67 = por %p65, %p66
    %p68 = scmp.ne.s32.totalorder %s59, %s60
    %p69 = scmp.eq.s32.totalorder %s14, 0
    %p70 = por %p68, %p69
    %p71 = scmp.ne.s32.totalorder %s59, %s60
    %p72 = scmp.eq.s32.totalorder %s15, 3
    %p73 = por %p71, %p72
    %p75 = scmp.ne.s32.totalorder %s60, %s74
    %p76 = scmp.eq.s32.totalorder %s15, 0
    %p77 = por %p75, %p76
    %s79 = sadd.s32 %s78, 1
    %p82 = scmp.eq.s32.totalorder %s9, 3
    %p83 = scmp.ne.s32.totalorder %s78, %s80
    %p84 = scmp.eq.s32.totalorder %s9, 0
    %p85 = por %p83, %p84
    %p86 = scmp.ne.s32.totalorder %s78, %s80
    %p87 = scmp.eq.s32.totalorder %s14, 3
    %p88 = por %p86, %p87
    %p89 = scmp.ne.s32.totalorder %s80, %s81
    %p90 = scmp.eq.s32.totalorder %s14, 0
    %p91 = por %p89, %p90
    %p92 = scmp.ne.s32.totalorder %s80, %s81
    %p93 = scmp.eq.s32.totalorder %s15, 3
    %p94 = por %p92, %p93
    %p96 = scmp.ne.s32.totalorder %s81, %s95
    %p97 = scmp.eq.s32.totalorder %s15, 0
    %p98 = por %p96, %p97
    %s99 = ssub.s32 %s16, %s28
    %p100 = scmp.eq.s32.totalorder %s99, 0
    %s102 = sadd.s32 %s101, 1
    %s103 = scalar_select %p100, %s101, %s102
    %p106 = pneg %p100
    %p107 = scmp.eq.s32.totalorder %s9, 3
    %p108 = por %p106, %p107
    %p109 = scmp.ne.s32.totalorder %s101, %s104
    %p110 = scmp.eq.s32.totalorder %s9, 0
    %p111 = por %p109, %p110
    %p112 = scmp.ne.s32.totalorder %s101, %s104
    %p113 = scmp.eq.s32.totalorder %s14, 3
    %p114 = por %p112, %p113
    %p115 = scmp.ne.s32.totalorder %s104, %s105
    %p116 = scmp.eq.s32.totalorder %s14, 0
    %p117 = por %p115, %p116
    %p118 = scmp.ne.s32.totalorder %s104, %s105
    %p119 = scmp.eq.s32.totalorder %s15, 3
    %p120 = por %p118, %p119
    %p122 = scmp.ne.s32.totalorder %s105, %s121
    %p123 = scmp.eq.s32.totalorder %s15, 0
    %p124 = por %p122, %p123
    %p125 = scmp.le.s32.totalorder 1, %s9
    %p126 = scmp.lt.s32.totalorder %s9, 5
    %p127 = pnand %p125, %p126
    %p128 = pneg %p127
    // Predicated region
    $region9: #{tpu_custom_call.1} parent=5 // pred_check
      _
    $region10: #{tpu_custom_call.1} parent=5 // pred_check_branch
      %130 = sbr.rel (%p127) target = $region12
    $region11: #{tpu_custom_call.1} parent=5 // pred_region
      %s131 = ssub.s32 %s9, 1
      // Predicated region
      $region13: #{tpu_custom_call.1} parent=11 // pred_check
        %p132 = pneg %p70
      $region14: #{tpu_custom_call.1} parent=11 // pred_check_branch
        %134 = sbr.rel (%p132) target = $region16
      $region15: #{tpu_custom_call.1} parent=11 // pred_region
        _
      $region16: #{tpu_custom_call.1} parent=11 // pred_fallthru
        _
      // Predicated region
      $region17: #{tpu_custom_call.1} parent=11 // pred_check
        %p135 = pneg %p91
      $region18: #{tpu_custom_call.1} parent=11 // pred_check_branch
        %137 = sbr.rel (%p135) target = $region20
      $region19: #{tpu_custom_call.1} parent=11 // pred_region
        _
      $region20: #{tpu_custom_call.1} parent=11 // pred_fallthru
        _
    $region12: #{tpu_custom_call.1} parent=5 // pred_fallthru
      _
    %p138 = scmp.lt.s32.totalorder %s9, 4
    // Predicated region
    $region21: #{tpu_custom_call.1} parent=5 // pred_check
      %p139 = pneg %p138
    $region22: #{tpu_custom_call.1} parent=5 // pred_check_branch
      %141 = sbr.rel (%p139) target = $region24
    $region23: #{tpu_custom_call.1} parent=5 // pred_region
      // Predicated region
      $region25: #{tpu_custom_call.1} parent=23 // pred_check
        %p142 = pneg %p43
      $region26: #{tpu_custom_call.1} parent=23 // pred_check_branch
        %144 = sbr.rel (%p142) target = $region28
      $region27: #{tpu_custom_call.1} parent=23 // pred_region
        %p145 = scmp.lt.s32.totalorder %s16, 1
        %s146 = scalar_select %p145, %s16, 1
        %p147 = scmp.lt.s32.totalorder %s17, 1
        %s148 = scalar_select %p147, %s17, 1
        %s149 = smul.addr %s146, 2
        %s150 = sadd.s32 %s148, %s149
        %s151 = smul.addr %s150, 2
        %s152 = scalar_lea.vmem %s0, %s151
      $region28: #{tpu_custom_call.1} parent=23 // pred_fallthru
        _
    $region24: #{tpu_custom_call.1} parent=5 // pred_fallthru
      _
    %p153 = scmp.le.s32.totalorder 1, %s9
    %p154 = scmp.lt.s32.totalorder %s9, 5
    %p155 = pnand %p153, %p154
    %p156 = pneg %p155
    // Predicated region
    $region29: #{tpu_custom_call.1} parent=5 // pred_check
      _
    $region30: #{tpu_custom_call.1} parent=5 // pred_check_branch
      %158 = sbr.rel (%p155) target = $region32
    $region31: #{tpu_custom_call.1} parent=5 // pred_region
      %s159 = ssub.s32 %s9, 1
      %p160 = scmp.lt.s32.totalorder %s18, 1
      %s161 = scalar_select %p160, %s18, 1
      %p162 = scmp.lt.s32.totalorder %s19, 1
      %s163 = scalar_select %p162, %s19, 1
      %s164 = smul.addr %s161, 2
      %s165 = sadd.s32 %s163, %s164
      %s166 = smul.addr %s165, 2
      %s167 = scalar_lea.vmem %s0, %s166
      %p168 = pneg %p49
      %p169 = pneg %p46
      %p170 = pneg %p70
      %p171 = pneg %p67
      %p172 = pneg %p91
      %p173 = pneg %p88
      %p174 = pneg %p117
      %p175 = pneg %p114
      %p176 = scmp.lt.s32.totalorder %s18, 1
      %s177 = scalar_select %p176, %s18, 1
      %s178 = smul.addr %s177, 32
      %s179 = smul.addr %s178, 8
      %s180 = scalar_lea.vmem %s3, %s179
      %p181 = scmp.lt.s32.totalorder %s18, 1
      %s182 = scalar_select %p181, %s18, 1
      %p183 = scmp.lt.s32.totalorder %s19, 1
      %s184 = scalar_select %p183, %s19, 1
      %s185 = smul.addr %s182, 2
      %s186 = sadd.s32 %s184, %s185
      %s187 = smul.addr %s186, 2
      %s188 = scalar_lea.vmem %s0, %s187
      %p189 = scmp.lt.s32.totalorder %s18, 1
      %s190 = scalar_select %p189, %s18, 1
      %s191 = smul.addr %s190, 32
      %s192 = smul.addr %s191, 8
      %s193 = scalar_lea.vmem %s3, %s192
      %p195 = scmp.eq.s32.totalorder %s19, 0
      // Predicated region
      $region33: #{tpu_custom_call.1} parent=31 // pred_check
        %p196 = pneg %p195
      $region34: #{tpu_custom_call.1} parent=31 // pred_check_branch
        %198 = sbr.rel (%p196) target = $region36
      $region35: #{tpu_custom_call.1} parent=31 // pred_region
        %199 = vst [vmem:[#allocation2] sm:$0xff] 0.0
        %200 = vst [vmem:[#allocation2 + $0x8] sm:$0xff] 0.0
        %201 = vst [vmem:[#allocation2 + $0x10] sm:$0xff] 0.0
        %202 = vst [vmem:[#allocation2 + $0x18] sm:$0xff] 0.0
        %203 = vst [vmem:[#allocation2 + $0x20] sm:$0xff] 0.0
        %204 = vst [vmem:[#allocation2 + $0x28] sm:$0xff] 0.0
        %205 = vst [vmem:[#allocation2 + $0x30] sm:$0xff] 0.0
        %206 = vst [vmem:[#allocation2 + $0x38] sm:$0xff] 0.0
        %207 = vst [vmem:[#allocation2 + $0x40] sm:$0xff] 0.0
        %208 = vst [vmem:[#allocation2 + $0x48] sm:$0xff] 0.0
        %209 = vst [vmem:[#allocation2 + $0x50] sm:$0xff] 0.0
        %210 = vst [vmem:[#allocation2 + $0x58] sm:$0xff] 0.0
        %211 = vst [vmem:[#allocation2 + $0x60] sm:$0xff] 0.0
        %212 = vst [vmem:[#allocation2 + $0x68] sm:$0xff] 0.0
        %213 = vst [vmem:[#allocation2 + $0x70] sm:$0xff] 0.0
        %214 = vst [vmem:[#allocation2 + $0x78] sm:$0xff] 0.0
        %215 = vst [vmem:[#allocation2 + $0x80] sm:$0xff] 0.0
        %216 = vst [vmem:[#allocation2 + $0x88] sm:$0xff] 0.0
        %217 = vst [vmem:[#allocation2 + $0x90] sm:$0xff] 0.0
        %218 = vst [vmem:[#allocation2 + $0x98] sm:$0xff] 0.0
        %219 = vst [vmem:[#allocation2 + $0xa0] sm:$0xff] 0.0
        %220 = vst [vmem:[#allocation2 + $0xa8] sm:$0xff] 0.0
        %221 = vst [vmem:[#allocation2 + $0xb0] sm:$0xff] 0.0
        %222 = vst [vmem:[#allocation2 + $0xb8] sm:$0xff] 0.0
        %223 = vst [vmem:[#allocation2 + $0xc0] sm:$0xff] 0.0
        %224 = vst [vmem:[#allocation2 + $0xc8] sm:$0xff] 0.0
        %225 = vst [vmem:[#allocation2 + $0xd0] sm:$0xff] 0.0
        %226 = vst [vmem:[#allocation2 + $0xd8] sm:$0xff] 0.0
        %227 = vst [vmem:[#allocation2 + $0xe0] sm:$0xff] 0.0
        %228 = vst [vmem:[#allocation2 + $0xe8] sm:$0xff] 0.0
        %229 = vst [vmem:[#allocation2 + $0xf0] sm:$0xff] 0.0
        %230 = vst [vmem:[#allocation2 + $0xf8] sm:$0xff] 0.0
      $region36: #{tpu_custom_call.1} parent=31 // pred_fallthru
        _
      %v231 = vld [vmem:[%s188] sm:$0x3]
      %v232 = vld [vmem:[%s1] sm:$0xf]
      %v233 = vld [vmem:[%s1 + $0x4] sm:$0xf]
      %v234 = vld [vmem:[%s1 + $0x8] sm:$0xf]
      %v235 = vld [vmem:[%s1 + $0xc] sm:$0xf]
      %v236 = vld [vmem:[%s1 + $0x10] sm:$0xf]
      %v237 = vld [vmem:[%s1 + $0x14] sm:$0xf]
      %v238 = vld [vmem:[%s1 + $0x18] sm:$0xf]
      %v239 = vld [vmem:[%s1 + $0x1c] sm:$0xf]
      %v240 = vld [vmem:[%s1 + $0x20] sm:$0xf]
      %v241 = vld [vmem:[%s1 + $0x24] sm:$0xf]
      %v242 = vld [vmem:[%s1 + $0x28] sm:$0xf]
      %v243 = vld [vmem:[%s1 + $0x2c] sm:$0xf]
      %v244 = vld [vmem:[%s1 + $0x30] sm:$0xf]
      %v245 = vld [vmem:[%s1 + $0x34] sm:$0xf]
      %v246 = vld [vmem:[%s1 + $0x38] sm:$0xf]
      %v247 = vld [vmem:[%s1 + $0x3c] sm:$0xf]
      %v248 = vld [vmem:[%s1 + $0x40] sm:$0xf]
      %v249 = vld [vmem:[%s1 + $0x44] sm:$0xf]
      %v250 = vld [vmem:[%s1 + $0x48] sm:$0xf]
      %v251 = vld [vmem:[%s1 + $0x4c] sm:$0xf]
      %v252 = vld [vmem:[%s1 + $0x50] sm:$0xf]
      %v253 = vld [vmem:[%s1 + $0x54] sm:$0xf]
      %v254 = vld [vmem:[%s1 + $0x58] sm:$0xf]
      %v255 = vld [vmem:[%s1 + $0x5c] sm:$0xf]
      %v256 = vld [vmem:[%s1 + $0x60] sm:$0xf]
      %v257 = vld [vmem:[%s1 + $0x64] sm:$0xf]
      %v258 = vld [vmem:[%s1 + $0x68] sm:$0xf]
      %v259 = vld [vmem:[%s1 + $0x6c] sm:$0xf]
      %v260 = vld [vmem:[%s1 + $0x70] sm:$0xf]
      %v261 = vld [vmem:[%s1 + $0x74] sm:$0xf]
      %v262 = vld [vmem:[%s1 + $0x78] sm:$0xf]
      %v263 = vld [vmem:[%s1 + $0x7c] sm:$0xf]
      %v264 = vld [vmem:[%s2] sm:$0xff]
      %v265 = vld [vmem:[%s2 + $0x8] sm:$0xff]
      %v266 = vld [vmem:[%s2 + $0x10] sm:$0xff]
      %v267 = vld [vmem:[%s2 + $0x18] sm:$0xff]
      %v268 = vld [vmem:[%s2 + $0x20] sm:$0xff]
      %v269 = vld [vmem:[%s2 + $0x28] sm:$0xff]
      %v270 = vld [vmem:[%s2 + $0x30] sm:$0xff]
      %v271 = vld [vmem:[%s2 + $0x38] sm:$0xff]
      %v272 = vld [vmem:[%s2 + $0x40] sm:$0xff]
      %v273 = vld [vmem:[%s2 + $0x48] sm:$0xff]
      %v274 = vld [vmem:[%s2 + $0x50] sm:$0xff]
      %v275 = vld [vmem:[%s2 + $0x58] sm:$0xff]
      %v276 = vld [vmem:[%s2 + $0x60] sm:$0xff]
      %v277 = vld [vmem:[%s2 + $0x68] sm:$0xff]
      %v278 = vld [vmem:[%s2 + $0x70] sm:$0xff]
      %v279 = vld [vmem:[%s2 + $0x78] sm:$0xff]
      %v280 = vld [vmem:[%s2 + $0x80] sm:$0xff]
      %v281 = vld [vmem:[%s2 + $0x88] sm:$0xff]
      %v282 = vld [vmem:[%s2 + $0x90] sm:$0xff]
      %v283 = vld [vmem:[%s2 + $0x98] sm:$0xff]
      %v284 = vld [vmem:[%s2 + $0xa0] sm:$0xff]
      %v285 = vld [vmem:[%s2 + $0xa8] sm:$0xff]
      %v286 = vld [vmem:[%s2 + $0xb0] sm:$0xff]
      %v287 = vld [vmem:[%s2 + $0xb8] sm:$0xff]
      %v288 = vld [vmem:[%s2 + $0xc0] sm:$0xff]
      %v289 = vld [vmem:[%s2 + $0xc8] sm:$0xff]
      %v290 = vld [vmem:[%s2 + $0xd0] sm:$0xff]
      %v291 = vld [vmem:[%s2 + $0xd8] sm:$0xff]
      %v292 = vld [vmem:[%s2 + $0xe0] sm:$0xff]
      %v293 = vld [vmem:[%s2 + $0xe8] sm:$0xff]
      %v294 = vld [vmem:[%s2 + $0xf0] sm:$0xff]
      %v295 = vld [vmem:[%s2 + $0xf8] sm:$0xff]
      %297 = vset.pattern.permute.xlu0 0
      %298 = vperm.xlu0 %297, %v264
      %v299 = vpop.permute.xlu0 %298
      %302 = vset.pattern.permute.xlu0 0
      %303 = vperm.xlu0 %302, %v265
      %v304 = vpop.permute.xlu0 %303
      %307 = vset.pattern.permute.xlu0 0
      %308 = vperm.xlu0 %307, %v266
      %v309 = vpop.permute.xlu0 %308
      %312 = vset.pattern.permute.xlu0 0
      %313 = vperm.xlu0 %312, %v267
      %v314 = vpop.permute.xlu0 %313
      %317 = vset.pattern.permute.xlu0 0
      %318 = vperm.xlu0 %317, %v268
      %v319 = vpop.permute.xlu0 %318
      %322 = vset.pattern.permute.xlu0 0
      %323 = vperm.xlu0 %322, %v269
      %v324 = vpop.permute.xlu0 %323
      %327 = vset.pattern.permute.xlu0 0
      %328 = vperm.xlu0 %327, %v270
      %v329 = vpop.permute.xlu0 %328
      %332 = vset.pattern.permute.xlu0 0
      %333 = vperm.xlu0 %332, %v271
      %v334 = vpop.permute.xlu0 %333
      %337 = vset.pattern.permute.xlu0 0
      %338 = vperm.xlu0 %337, %v272
      %v339 = vpop.permute.xlu0 %338
      %342 = vset.pattern.permute.xlu0 0
      %343 = vperm.xlu0 %342, %v273
      %v344 = vpop.permute.xlu0 %343
      %347 = vset.pattern.permute.xlu0 0
      %348 = vperm.xlu0 %347, %v274
      %v349 = vpop.permute.xlu0 %348
      %352 = vset.pattern.permute.xlu0 0
      %353 = vperm.xlu0 %352, %v275
      %v354 = vpop.permute.xlu0 %353
      %357 = vset.pattern.permute.xlu0 0
      %358 = vperm.xlu0 %357, %v276
      %v359 = vpop.permute.xlu0 %358
      %362 = vset.pattern.permute.xlu0 0
      %363 = vperm.xlu0 %362, %v277
      %v364 = vpop.permute.xlu0 %363
      %367 = vset.pattern.permute.xlu0 0
      %368 = vperm.xlu0 %367, %v278
      %v369 = vpop.permute.xlu0 %368
      %372 = vset.pattern.permute.xlu0 0
      %373 = vperm.xlu0 %372, %v279
      %v374 = vpop.permute.xlu0 %373
      %377 = vset.pattern.permute.xlu0 0
      %378 = vperm.xlu0 %377, %v280
      %v379 = vpop.permute.xlu0 %378
      %382 = vset.pattern.permute.xlu0 0
      %383 = vperm.xlu0 %382, %v281
      %v384 = vpop.permute.xlu0 %383
      %387 = vset.pattern.permute.xlu0 0
      %388 = vperm.xlu0 %387, %v282
      %v389 = vpop.permute.xlu0 %388
      %392 = vset.pattern.permute.xlu0 0
      %393 = vperm.xlu0 %392, %v283
      %v394 = vpop.permute.xlu0 %393
      %397 = vset.pattern.permute.xlu0 0
      %398 = vperm.xlu0 %397, %v284
      %v399 = vpop.permute.xlu0 %398
      %402 = vset.pattern.permute.xlu0 0
      %403 = vperm.xlu0 %402, %v285
      %v404 = vpop.permute.xlu0 %403
      %407 = vset.pattern.permute.xlu0 0
      %408 = vperm.xlu0 %407, %v286
      %v409 = vpop.permute.xlu0 %408
      %412 = vset.pattern.permute.xlu0 0
      %413 = vperm.xlu0 %412, %v287
      %v414 = vpop.permute.xlu0 %413
      %417 = vset.pattern.permute.xlu0 0
      %418 = vperm.xlu0 %417, %v288
      %v419 = vpop.permute.xlu0 %418
      %422 = vset.pattern.permute.xlu0 0
      %423 = vperm.xlu0 %422, %v289
      %v424 = vpop.permute.xlu0 %423
      %427 = vset.pattern.permute.xlu0 0
      %428 = vperm.xlu0 %427, %v290
      %v429 = vpop.permute.xlu0 %428
      %432 = vset.pattern.permute.xlu0 0
      %433 = vperm.xlu0 %432, %v291
      %v434 = vpop.permute.xlu0 %433
      %437 = vset.pattern.permute.xlu0 0
      %438 = vperm.xlu0 %437, %v292
      %v439 = vpop.permute.xlu0 %438
      %442 = vset.pattern.permute.xlu0 0
      %443 = vperm.xlu0 %442, %v293
      %v444 = vpop.permute.xlu0 %443
      %447 = vset.pattern.permute.xlu0 0
      %448 = vperm.xlu0 %447, %v294
      %v449 = vpop.permute.xlu0 %448
      %452 = vset.pattern.permute.xlu0 0
      %453 = vperm.xlu0 %452, %v295
      %v454 = vpop.permute.xlu0 %453
      %v488 = vunpack.c.l.b16 %v232
      %v489 = vunpack.c.l.b16 %v233
      %v490 = vunpack.c.l.b16 %v234
      %v491 = vunpack.c.l.b16 %v235
      %v492 = vunpack.c.l.b16 %v236
      %v493 = vunpack.c.l.b16 %v237
      %v494 = vunpack.c.l.b16 %v238
      %v495 = vunpack.c.l.b16 %v239
      %v496 = vunpack.c.l.b16 %v240
      %v497 = vunpack.c.l.b16 %v241
      %v498 = vunpack.c.l.b16 %v242
      %v499 = vunpack.c.l.b16 %v243
      %v500 = vunpack.c.l.b16 %v244
      %v501 = vunpack.c.l.b16 %v245
      %v502 = vunpack.c.l.b16 %v246
      %v503 = vunpack.c.l.b16 %v247
      %v504 = vunpack.c.l.b16 %v248
      %v505 = vunpack.c.l.b16 %v249
      %v506 = vunpack.c.l.b16 %v250
      %v507 = vunpack.c.l.b16 %v251
      %v508 = vunpack.c.l.b16 %v252
      %v509 = vunpack.c.l.b16 %v253
      %v510 = vunpack.c.l.b16 %v254
      %v511 = vunpack.c.l.b16 %v255
      %v512 = vunpack.c.l.b16 %v256
      %v513 = vunpack.c.l.b16 %v257
      %v514 = vunpack.c.l.b16 %v258
      %v515 = vunpack.c.l.b16 %v259
      %v516 = vunpack.c.l.b16 %v260
      %v517 = vunpack.c.l.b16 %v261
      %v518 = vunpack.c.l.b16 %v262
      %v519 = vunpack.c.l.b16 %v263
      %v520 = vpack.c.b16 %v489, %v488
      %v521 = vpack.c.b16 %v491, %v490
      %v522 = vpack.c.b16 %v493, %v492
      %v523 = vpack.c.b16 %v495, %v494
      %v524 = vpack.c.b16 %v497, %v496
      %v525 = vpack.c.b16 %v499, %v498
      %v526 = vpack.c.b16 %v501, %v500
      %v527 = vpack.c.b16 %v503, %v502
      %v528 = vpack.c.b16 %v505, %v504
      %v529 = vpack.c.b16 %v507, %v506
      %v530 = vpack.c.b16 %v509, %v508
      %v531 = vpack.c.b16 %v511, %v510
      %v532 = vpack.c.b16 %v513, %v512
      %v533 = vpack.c.b16 %v515, %v514
      %v534 = vpack.c.b16 %v517, %v516
      %v535 = vpack.c.b16 %v519, %v518
      %vm536 = vcmask 31744
      %v538 = vsel %vm536, %v520, 0
      %v541 = vsel %vm536, %v521, 0
      %v544 = vsel %vm536, %v522, 0
      %v547 = vsel %vm536, %v523, 0
      %v550 = vsel %vm536, %v524, 0
      %v553 = vsel %vm536, %v525, 0
      %v556 = vsel %vm536, %v526, 0
      %v559 = vsel %vm536, %v527, 0
      %v562 = vsel %vm536, %v528, 0
      %v565 = vsel %vm536, %v529, 0
      %v568 = vsel %vm536, %v530, 0
      %v571 = vsel %vm536, %v531, 0
      %v574 = vsel %vm536, %v532, 0
      %v577 = vsel %vm536, %v533, 0
      %v580 = vsel %vm536, %v534, 0
      %v583 = vsel %vm536, %v535, 0
      %vm585 = vcmask 1041408
      %v587 = vsel %vm585, %v231, 0
      %589 = vmatpush.bf16.msra.mxu0 0
      %590 = vmatpush.bf16.msra.mxu0 0
      %591 = vmatpush.bf16.msra.mxu0 0
      %592 = vmatpush.bf16.msra.mxu0 0
      %593 = vmatpush.bf16.msra.mxu0 0
      %594 = vmatpush.bf16.msra.mxu0 0
      %595 = vmatpush.bf16.msra.mxu0 0
      %596 = vmatpush.bf16.msra.mxu0 %v587
      %597 = vmatmul.bf16.gmra.mxu0 %v538
      %v598 = vpop.f32.mrf.mxu0
      %v599 = vadd.f32 %v299, %v598
      %v600 = vpop.f32.mrf.mxu0
      %v601 = vadd.f32 %v304, %v600
      %602 = vmatmul.bf16.gmra.mxu0 %v541
      %v603 = vpop.f32.mrf.mxu0
      %v604 = vadd.f32 %v309, %v603
      %v605 = vpop.f32.mrf.mxu0
      %v606 = vadd.f32 %v314, %v605
      %607 = vmatmul.bf16.gmra.mxu0 %v544
      %v608 = vpop.f32.mrf.mxu0
      %v609 = vadd.f32 %v319, %v608
      %v610 = vpop.f32.mrf.mxu0
      %v611 = vadd.f32 %v324, %v610
      %612 = vmatmul.bf16.gmra.mxu0 %v547
      %v613 = vpop.f32.mrf.mxu0
      %v614 = vadd.f32 %v329, %v613
      %v615 = vpop.f32.mrf.mxu0
      %v616 = vadd.f32 %v334, %v615
      %617 = vmatmul.bf16.gmra.mxu0 %v550
      %v618 = vpop.f32.mrf.mxu0
      %v619 = vadd.f32 %v339, %v618
      %v620 = vpop.f32.mrf.mxu0
      %v621 = vadd.f32 %v344, %v620
      %622 = vmatmul.bf16.gmra.mxu0 %v553
      %v623 = vpop.f32.mrf.mxu0
      %v624 = vadd.f32 %v349, %v623
      %v625 = vpop.f32.mrf.mxu0
      %v626 = vadd.f32 %v354, %v625
      %627 = vmatmul.bf16.gmra.mxu0 %v556
      %v628 = vpop.f32.mrf.mxu0
      %v629 = vadd.f32 %v359, %v628
      %v630 = vpop.f32.mrf.mxu0
      %v631 = vadd.f32 %v364, %v630
      %632 = vmatmul.bf16.gmra.mxu0 %v559
      %v633 = vpop.f32.mrf.mxu0
      %v634 = vadd.f32 %v369, %v633
      %v635 = vpop.f32.mrf.mxu0
      %v636 = vadd.f32 %v374, %v635
      %637 = vmatmul.bf16.gmra.mxu0 %v562
      %v638 = vpop.f32.mrf.mxu0
      %v639 = vadd.f32 %v379, %v638
      %v640 = vpop.f32.mrf.mxu0
      %v641 = vadd.f32 %v384, %v640
      %642 = vmatmul.bf16.gmra.mxu0 %v565
      %v643 = vpop.f32.mrf.mxu0
      %v644 = vadd.f32 %v389, %v643
      %v645 = vpop.f32.mrf.mxu0
      %v646 = vadd.f32 %v394, %v645
      %647 = vmatmul.bf16.gmra.mxu0 %v568
      %v648 = vpop.f32.mrf.mxu0
      %v649 = vadd.f32 %v399, %v648
      %v650 = vpop.f32.mrf.mxu0
      %v651 = vadd.f32 %v404, %v650
      %652 = vmatmul.bf16.gmra.mxu0 %v571
      %v653 = vpop.f32.mrf.mxu0
      %v654 = vadd.f32 %v409, %v653
      %v655 = vpop.f32.mrf.mxu0
      %v656 = vadd.f32 %v414, %v655
      %657 = vmatmul.bf16.gmra.mxu0 %v574
      %v658 = vpop.f32.mrf.mxu0
      %v659 = vadd.f32 %v419, %v658
      %v660 = vpop.f32.mrf.mxu0
      %v661 = vadd.f32 %v424, %v660
      %662 = vmatmul.bf16.gmra.mxu0 %v577
      %v663 = vpop.f32.mrf.mxu0
      %v664 = vadd.f32 %v429, %v663
      %v665 = vpop.f32.mrf.mxu0
      %v666 = vadd.f32 %v434, %v665
      %667 = vmatmul.bf16.gmra.mxu0 %v580
      %v668 = vpop.f32.mrf.mxu0
      %v669 = vadd.f32 %v439, %v668
      %v670 = vpop.f32.mrf.mxu0
      %v671 = vadd.f32 %v444, %v670
      %672 = vmatmul.bf16.gmra.mxu0 %v583
      %v673 = vpop.f32.mrf.mxu0
      %v674 = vadd.f32 %v449, %v673
      %v675 = vpop.f32.mrf.mxu0
      %v676 = vadd.f32 %v454, %v675
      %677 = vdwg.mxu0
      %v678 = vmax.f32 %v599, 0.0
      %v679 = vmax.f32 %v601, 0.0
      %v680 = vmax.f32 %v604, 0.0
      %v681 = vmax.f32 %v606, 0.0
      %v682 = vmax.f32 %v609, 0.0
      %v683 = vmax.f32 %v611, 0.0
      %v684 = vmax.f32 %v614, 0.0
      %v685 = vmax.f32 %v616, 0.0
      %v686 = vmax.f32 %v619, 0.0
      %v687 = vmax.f32 %v621, 0.0
      %v688 = vmax.f32 %v624, 0.0
      %v689 = vmax.f32 %v626, 0.0
      %v690 = vmax.f32 %v629, 0.0
      %v691 = vmax.f32 %v631, 0.0
      %v692 = vmax.f32 %v634, 0.0
      %v693 = vmax.f32 %v636, 0.0
      %v694 = vmax.f32 %v639, 0.0
      %v695 = vmax.f32 %v641, 0.0
      %v696 = vmax.f32 %v644, 0.0
      %v697 = vmax.f32 %v646, 0.0
      %v698 = vmax.f32 %v649, 0.0
      %v699 = vmax.f32 %v651, 0.0
      %v700 = vmax.f32 %v654, 0.0
      %v701 = vmax.f32 %v656, 0.0
      %v702 = vmax.f32 %v659, 0.0
      %v703 = vmax.f32 %v661, 0.0
      %v704 = vmax.f32 %v664, 0.0
      %v705 = vmax.f32 %v666, 0.0
      %v706 = vmax.f32 %v669, 0.0
      %v707 = vmax.f32 %v671, 0.0
      %v708 = vmax.f32 %v674, 0.0
      %v709 = vmax.f32 %v676, 0.0
      %v710 = vld [vmem:[#allocation2] sm:$0xff]
      %v711 = vld [vmem:[#allocation2 + $0x8] sm:$0xff]
      %v712 = vld [vmem:[#allocation2 + $0x10] sm:$0xff]
      %v713 = vld [vmem:[#allocation2 + $0x18] sm:$0xff]
      %v714 = vld [vmem:[#allocation2 + $0x20] sm:$0xff]
      %v715 = vld [vmem:[#allocation2 + $0x28] sm:$0xff]
      %v716 = vld [vmem:[#allocation2 + $0x30] sm:$0xff]
      %v717 = vld [vmem:[#allocation2 + $0x38] sm:$0xff]
      %v718 = vld [vmem:[#allocation2 + $0x40] sm:$0xff]
      %v719 = vld [vmem:[#allocation2 + $0x48] sm:$0xff]
      %v720 = vld [vmem:[#allocation2 + $0x50] sm:$0xff]
      %v721 = vld [vmem:[#allocation2 + $0x58] sm:$0xff]
      %v722 = vld [vmem:[#allocation2 + $0x60] sm:$0xff]
      %v723 = vld [vmem:[#allocation2 + $0x68] sm:$0xff]
      %v724 = vld [vmem:[#allocation2 + $0x70] sm:$0xff]
      %v725 = vld [vmem:[#allocation2 + $0x78] sm:$0xff]
      %v726 = vld [vmem:[#allocation2 + $0x80] sm:$0xff]
      %v727 = vld [vmem:[#allocation2 + $0x88] sm:$0xff]
      %v728 = vld [vmem:[#allocation2 + $0x90] sm:$0xff]
      %v729 = vld [vmem:[#allocation2 + $0x98] sm:$0xff]
      %v730 = vld [vmem:[#allocation2 + $0xa0] sm:$0xff]
      %v731 = vld [vmem:[#allocation2 + $0xa8] sm:$0xff]
      %v732 = vld [vmem:[#allocation2 + $0xb0] sm:$0xff]
      %v733 = vld [vmem:[#allocation2 + $0xb8] sm:$0xff]
      %v734 = vld [vmem:[#allocation2 + $0xc0] sm:$0xff]
      %v735 = vld [vmem:[#allocation2 + $0xc8] sm:$0xff]
      %v736 = vld [vmem:[#allocation2 + $0xd0] sm:$0xff]
      %v737 = vld [vmem:[#allocation2 + $0xd8] sm:$0xff]
      %v738 = vld [vmem:[#allocation2 + $0xe0] sm:$0xff]
      %v739 = vld [vmem:[#allocation2 + $0xe8] sm:$0xff]
      %v740 = vld [vmem:[#allocation2 + $0xf0] sm:$0xff]
      %v741 = vld [vmem:[#allocation2 + $0xf8] sm:$0xff]
      %v742 = vadd.f32 %v710, %v678
      %v743 = vadd.f32 %v711, %v679
      %v744 = vadd.f32 %v712, %v680
      %v745 = vadd.f32 %v713, %v681
      %v746 = vadd.f32 %v714, %v682
      %v747 = vadd.f32 %v715, %v683
      %v748 = vadd.f32 %v716, %v684
      %v749 = vadd.f32 %v717, %v685
      %v750 = vadd.f32 %v718, %v686
      %v751 = vadd.f32 %v719, %v687
      %v752 = vadd.f32 %v720, %v688
      %v753 = vadd.f32 %v721, %v689
      %v754 = vadd.f32 %v722, %v690
      %v755 = vadd.f32 %v723, %v691
      %v756 = vadd.f32 %v724, %v692
      %v757 = vadd.f32 %v725, %v693
      %v758 = vadd.f32 %v726, %v694
      %v759 = vadd.f32 %v727, %v695
      %v760 = vadd.f32 %v728, %v696
      %v761 = vadd.f32 %v729, %v697
      %v762 = vadd.f32 %v730, %v698
      %v763 = vadd.f32 %v731, %v699
      %v764 = vadd.f32 %v732, %v700
      %v765 = vadd.f32 %v733, %v701
      %v766 = vadd.f32 %v734, %v702
      %v767 = vadd.f32 %v735, %v703
      %v768 = vadd.f32 %v736, %v704
      %v769 = vadd.f32 %v737, %v705
      %v770 = vadd.f32 %v738, %v706
      %v771 = vadd.f32 %v739, %v707
      %v772 = vadd.f32 %v740, %v708
      %v773 = vadd.f32 %v741, %v709
      %774 = vst [vmem:[#allocation2] sm:$0xff] %v742
      %775 = vst [vmem:[#allocation2 + $0x8] sm:$0xff] %v743
      %776 = vst [vmem:[#allocation2 + $0x10] sm:$0xff] %v744
      %777 = vst [vmem:[#allocation2 + $0x18] sm:$0xff] %v745
      %778 = vst [vmem:[#allocation2 + $0x20] sm:$0xff] %v746
      %779 = vst [vmem:[#allocation2 + $0x28] sm:$0xff] %v747
      %780 = vst [vmem:[#allocation2 + $0x30] sm:$0xff] %v748
      %781 = vst [vmem:[#allocation2 + $0x38] sm:$0xff] %v749
      %782 = vst [vmem:[#allocation2 + $0x40] sm:$0xff] %v750
      %783 = vst [vmem:[#allocation2 + $0x48] sm:$0xff] %v751
      %784 = vst [vmem:[#allocation2 + $0x50] sm:$0xff] %v752
      %785 = vst [vmem:[#allocation2 + $0x58] sm:$0xff] %v753
      %786 = vst [vmem:[#allocation2 + $0x60] sm:$0xff] %v754
      %787 = vst [vmem:[#allocation2 + $0x68] sm:$0xff] %v755
      %788 = vst [vmem:[#allocation2 + $0x70] sm:$0xff] %v756
      %789 = vst [vmem:[#allocation2 + $0x78] sm:$0xff] %v757
      %790 = vst [vmem:[#allocation2 + $0x80] sm:$0xff] %v758
      %791 = vst [vmem:[#allocation2 + $0x88] sm:$0xff] %v759
      %792 = vst [vmem:[#allocation2 + $0x90] sm:$0xff] %v760
      %793 = vst [vmem:[#allocation2 + $0x98] sm:$0xff] %v761
      %794 = vst [vmem:[#allocation2 + $0xa0] sm:$0xff] %v762
      %795 = vst [vmem:[#allocation2 + $0xa8] sm:$0xff] %v763
      %796 = vst [vmem:[#allocation2 + $0xb0] sm:$0xff] %v764
      %797 = vst [vmem:[#allocation2 + $0xb8] sm:$0xff] %v765
      %798 = vst [vmem:[#allocation2 + $0xc0] sm:$0xff] %v766
      %799 = vst [vmem:[#allocation2 + $0xc8] sm:$0xff] %v767
      %800 = vst [vmem:[#allocation2 + $0xd0] sm:$0xff] %v768
      %801 = vst [vmem:[#allocation2 + $0xd8] sm:$0xff] %v769
      %802 = vst [vmem:[#allocation2 + $0xe0] sm:$0xff] %v770
      %803 = vst [vmem:[#allocation2 + $0xe8] sm:$0xff] %v771
      %804 = vst [vmem:[#allocation2 + $0xf0] sm:$0xff] %v772
      %805 = vst [vmem:[#allocation2 + $0xf8] sm:$0xff] %v773
      %p806 = scmp.eq.s32.totalorder %s19, 1
      // Predicated region
      $region37: #{tpu_custom_call.1} parent=31 // pred_check
        %p807 = pneg %p806
      $region38: #{tpu_custom_call.1} parent=31 // pred_check_branch
        %809 = sbr.rel (%p807) target = $region40
      $region39: #{tpu_custom_call.1} parent=31 // pred_region
        %v810 = vld [vmem:[#allocation2] sm:$0xff]
        %v811 = vld [vmem:[#allocation2 + $0x8] sm:$0xff]
        %v812 = vld [vmem:[#allocation2 + $0x10] sm:$0xff]
        %v813 = vld [vmem:[#allocation2 + $0x18] sm:$0xff]
        %v814 = vld [vmem:[#allocation2 + $0x20] sm:$0xff]
        %v815 = vld [vmem:[#allocation2 + $0x28] sm:$0xff]
        %v816 = vld [vmem:[#allocation2 + $0x30] sm:$0xff]
        %v817 = vld [vmem:[#allocation2 + $0x38] sm:$0xff]
        %v818 = vld [vmem:[#allocation2 + $0x40] sm:$0xff]
        %v819 = vld [vmem:[#allocation2 + $0x48] sm:$0xff]
        %v820 = vld [vmem:[#allocation2 + $0x50] sm:$0xff]
        %v821 = vld [vmem:[#allocation2 + $0x58] sm:$0xff]
        %v822 = vld [vmem:[#allocation2 + $0x60] sm:$0xff]
        %v823 = vld [vmem:[#allocation2 + $0x68] sm:$0xff]
        %v824 = vld [vmem:[#allocation2 + $0x70] sm:$0xff]
        %v825 = vld [vmem:[#allocation2 + $0x78] sm:$0xff]
        %v826 = vld [vmem:[#allocation2 + $0x80] sm:$0xff]
        %v827 = vld [vmem:[#allocation2 + $0x88] sm:$0xff]
        %v828 = vld [vmem:[#allocation2 + $0x90] sm:$0xff]
        %v829 = vld [vmem:[#allocation2 + $0x98] sm:$0xff]
        %v830 = vld [vmem:[#allocation2 + $0xa0] sm:$0xff]
        %v831 = vld [vmem:[#allocation2 + $0xa8] sm:$0xff]
        %v832 = vld [vmem:[#allocation2 + $0xb0] sm:$0xff]
        %v833 = vld [vmem:[#allocation2 + $0xb8] sm:$0xff]
        %v834 = vld [vmem:[#allocation2 + $0xc0] sm:$0xff]
        %v835 = vld [vmem:[#allocation2 + $0xc8] sm:$0xff]
        %v836 = vld [vmem:[#allocation2 + $0xd0] sm:$0xff]
        %v837 = vld [vmem:[#allocation2 + $0xd8] sm:$0xff]
        %v838 = vld [vmem:[#allocation2 + $0xe0] sm:$0xff]
        %v839 = vld [vmem:[#allocation2 + $0xe8] sm:$0xff]
        %v840 = vld [vmem:[#allocation2 + $0xf0] sm:$0xff]
        %v841 = vld [vmem:[#allocation2 + $0xf8] sm:$0xff]
        %842 = vadd.xlane.f32.xlu0 %v810
        %v843 = vpop.xlane.xlu0 %842
        %844 = vadd.xlane.f32.xlu0 %v811
        %v845 = vpop.xlane.xlu0 %844
        %846 = vadd.xlane.f32.xlu0 %v812
        %v847 = vpop.xlane.xlu0 %846
        %848 = vadd.xlane.f32.xlu0 %v813
        %v849 = vpop.xlane.xlu0 %848
        %850 = vadd.xlane.f32.xlu0 %v814
        %v851 = vpop.xlane.xlu0 %850
        %852 = vadd.xlane.f32.xlu0 %v815
        %v853 = vpop.xlane.xlu0 %852
        %854 = vadd.xlane.f32.xlu0 %v816
        %v855 = vpop.xlane.xlu0 %854
        %856 = vadd.xlane.f32.xlu0 %v817
        %v857 = vpop.xlane.xlu0 %856
        %858 = vadd.xlane.f32.xlu0 %v818
        %v859 = vpop.xlane.xlu0 %858
        %860 = vadd.xlane.f32.xlu0 %v819
        %v861 = vpop.xlane.xlu0 %860
        %862 = vadd.xlane.f32.xlu0 %v820
        %v863 = vpop.xlane.xlu0 %862
        %864 = vadd.xlane.f32.xlu0 %v821
        %v865 = vpop.xlane.xlu0 %864
        %866 = vadd.xlane.f32.xlu0 %v822
        %v867 = vpop.xlane.xlu0 %866
        %868 = vadd.xlane.f32.xlu0 %v823
        %v869 = vpop.xlane.xlu0 %868
        %870 = vadd.xlane.f32.xlu0 %v824
        %v871 = vpop.xlane.xlu0 %870
        %872 = vadd.xlane.f32.xlu0 %v825
        %v873 = vpop.xlane.xlu0 %872
        %874 = vadd.xlane.f32.xlu0 %v826
        %v875 = vpop.xlane.xlu0 %874
        %876 = vadd.xlane.f32.xlu0 %v827
        %v877 = vpop.xlane.xlu0 %876
        %878 = vadd.xlane.f32.xlu0 %v828
        %v879 = vpop.xlane.xlu0 %878
        %880 = vadd.xlane.f32.xlu0 %v829
        %v881 = vpop.xlane.xlu0 %880
        %882 = vadd.xlane.f32.xlu0 %v830
        %v883 = vpop.xlane.xlu0 %882
        %884 = vadd.xlane.f32.xlu0 %v831
        %v885 = vpop.xlane.xlu0 %884
        %886 = vadd.xlane.f32.xlu0 %v832
        %v887 = vpop.xlane.xlu0 %886
        %888 = vadd.xlane.f32.xlu0 %v833
        %v889 = vpop.xlane.xlu0 %888
        %890 = vadd.xlane.f32.xlu0 %v834
        %v891 = vpop.xlane.xlu0 %890
        %892 = vadd.xlane.f32.xlu0 %v835
        %v893 = vpop.xlane.xlu0 %892
        %894 = vadd.xlane.f32.xlu0 %v836
        %v895 = vpop.xlane.xlu0 %894
        %896 = vadd.xlane.f32.xlu0 %v837
        %v897 = vpop.xlane.xlu0 %896
        %898 = vadd.xlane.f32.xlu0 %v838
        %v899 = vpop.xlane.xlu0 %898
        %900 = vadd.xlane.f32.xlu0 %v839
        %v901 = vpop.xlane.xlu0 %900
        %902 = vadd.xlane.f32.xlu0 %v840
        %v903 = vpop.xlane.xlu0 %902
        %904 = vadd.xlane.f32.xlu0 %v841
        %v905 = vpop.xlane.xlu0 %904
        %v906 = vmul.f32 %v843, 0.00390625
        %v907 = vmul.f32 %v845, 0.00390625
        %v908 = vmul.f32 %v847, 0.00390625
        %v909 = vmul.f32 %v849, 0.00390625
        %v910 = vmul.f32 %v851, 0.00390625
        %v911 = vmul.f32 %v853, 0.00390625
        %v912 = vmul.f32 %v855, 0.00390625
        %v913 = vmul.f32 %v857, 0.00390625
        %v914 = vmul.f32 %v859, 0.00390625
        %v915 = vmul.f32 %v861, 0.00390625
        %v916 = vmul.f32 %v863, 0.00390625
        %v917 = vmul.f32 %v865, 0.00390625
        %v918 = vmul.f32 %v867, 0.00390625
        %v919 = vmul.f32 %v869, 0.00390625
        %v920 = vmul.f32 %v871, 0.00390625
        %v921 = vmul.f32 %v873, 0.00390625
        %v922 = vmul.f32 %v875, 0.00390625
        %v923 = vmul.f32 %v877, 0.00390625
        %v924 = vmul.f32 %v879, 0.00390625
        %v925 = vmul.f32 %v881, 0.00390625
        %v926 = vmul.f32 %v883, 0.00390625
        %v927 = vmul.f32 %v885, 0.00390625
        %v928 = vmul.f32 %v887, 0.00390625
        %v929 = vmul.f32 %v889, 0.00390625
        %v930 = vmul.f32 %v891, 0.00390625
        %v931 = vmul.f32 %v893, 0.00390625
        %v932 = vmul.f32 %v895, 0.00390625
        %v933 = vmul.f32 %v897, 0.00390625
        %v934 = vmul.f32 %v899, 0.00390625
        %v935 = vmul.f32 %v901, 0.00390625
        %v936 = vmul.f32 %v903, 0.00390625
        %v937 = vmul.f32 %v905, 0.00390625
        %vm938 = vcmask 7168
        %939 = vst.msk [vmem:[%s193] sm:$0xff] %vm938, %v906
        %940 = vst.msk [vmem:[%s193 + $0x8] sm:$0xff] %vm938, %v907
        %941 = vst.msk [vmem:[%s193 + $0x10] sm:$0xff] %vm938, %v908
        %942 = vst.msk [vmem:[%s193 + $0x18] sm:$0xff] %vm938, %v909
        %943 = vst.msk [vmem:[%s193 + $0x20] sm:$0xff] %vm938, %v910
        %944 = vst.msk [vmem:[%s193 + $0x28] sm:$0xff] %vm938, %v911
        %945 = vst.msk [vmem:[%s193 + $0x30] sm:$0xff] %vm938, %v912
        %946 = vst.msk [vmem:[%s193 + $0x38] sm:$0xff] %vm938, %v913
        %947 = vst.msk [vmem:[%s193 + $0x40] sm:$0xff] %vm938, %v914
        %948 = vst.msk [vmem:[%s193 + $0x48] sm:$0xff] %vm938, %v915
        %949 = vst.msk [vmem:[%s193 + $0x50] sm:$0xff] %vm938, %v916
        %950 = vst.msk [vmem:[%s193 + $0x58] sm:$0xff] %vm938, %v917
        %951 = vst.msk [vmem:[%s193 + $0x60] sm:$0xff] %vm938, %v918
        %952 = vst.msk [vmem:[%s193 + $0x68] sm:$0xff] %vm938, %v919
        %953 = vst.msk [vmem:[%s193 + $0x70] sm:$0xff] %vm938, %v920
        %954 = vst.msk [vmem:[%s193 + $0x78] sm:$0xff] %vm938, %v921
        %955 = vst.msk [vmem:[%s193 + $0x80] sm:$0xff] %vm938, %v922
        %956 = vst.msk [vmem:[%s193 + $0x88] sm:$0xff] %vm938, %v923
        %957 = vst.msk [vmem:[%s193 + $0x90] sm:$0xff] %vm938, %v924
        %958 = vst.msk [vmem:[%s193 + $0x98] sm:$0xff] %vm938, %v925
        %959 = vst.msk [vmem:[%s193 + $0xa0] sm:$0xff] %vm938, %v926
        %960 = vst.msk [vmem:[%s193 + $0xa8] sm:$0xff] %vm938, %v927
        %961 = vst.msk [vmem:[%s193 + $0xb0] sm:$0xff] %vm938, %v928
        %962 = vst.msk [vmem:[%s193 + $0xb8] sm:$0xff] %vm938, %v929
        %963 = vst.msk [vmem:[%s193 + $0xc0] sm:$0xff] %vm938, %v930
        %964 = vst.msk [vmem:[%s193 + $0xc8] sm:$0xff] %vm938, %v931
        %965 = vst.msk [vmem:[%s193 + $0xd0] sm:$0xff] %vm938, %v932
        %966 = vst.msk [vmem:[%s193 + $0xd8] sm:$0xff] %vm938, %v933
        %967 = vst.msk [vmem:[%s193 + $0xe0] sm:$0xff] %vm938, %v934
        %968 = vst.msk [vmem:[%s193 + $0xe8] sm:$0xff] %vm938, %v935
        %969 = vst.msk [vmem:[%s193 + $0xf0] sm:$0xff] %vm938, %v936
        %970 = vst.msk [vmem:[%s193 + $0xf8] sm:$0xff] %vm938, %v937
      $region40: #{tpu_custom_call.1} parent=31 // pred_fallthru
        _
      %p971 = scmp.lt.s32.totalorder %s18, 1
      %s972 = scalar_select %p971, %s18, 1
      %s973 = smul.addr %s972, 32
      %s974 = smul.addr %s973, 8
      %s975 = scalar_lea.vmem %s3, %s974
      // Predicated region
      $region41: #{tpu_custom_call.1} parent=31 // pred_check
        %p976 = pneg %p114
      $region42: #{tpu_custom_call.1} parent=31 // pred_check_branch
        %978 = sbr.rel (%p976) target = $region44
      $region43: #{tpu_custom_call.1} parent=31 // pred_region
        _
      $region44: #{tpu_custom_call.1} parent=31 // pred_fallthru
        _
    $region32: #{tpu_custom_call.1} parent=5 // pred_fallthru
      _
    %p979 = scmp.le.s32.totalorder 2, %s9
    // Predicated region
    $region45: #{tpu_custom_call.1} parent=5 // pred_check
      %p980 = pneg %p979
    $region46: #{tpu_custom_call.1} parent=5 // pred_check_branch
      %982 = sbr.rel (%p980) target = $region48
    $region47: #{tpu_custom_call.1} parent=5 // pred_region
      %s983 = ssub.s32 %s9, 2
      // Predicated region
      $region49: #{tpu_custom_call.1} parent=47 // pred_check
        %p984 = pneg %p120
      $region50: #{tpu_custom_call.1} parent=47 // pred_check_branch
        %986 = sbr.rel (%p984) target = $region52
      $region51: #{tpu_custom_call.1} parent=47 // pred_region
        %p987 = scmp.lt.s32.totalorder %s20, 1
        %s988 = scalar_select %p987, %s20, 1
        %s989 = smul.addr %s988, 32
        %s990 = smul.addr %s989, 8
        %s991 = scalar_lea.vmem %s3, %s990
      $region52: #{tpu_custom_call.1} parent=47 // pred_fallthru
        _
    $region48: #{tpu_custom_call.1} parent=5 // pred_fallthru
      _
  $region6: #{tpu_custom_call.1} parent=0 // loop_footer
    %s13 = sadd.s32 1, %s9
  $region7: #{tpu_custom_call.1} parent=0 // loop_footer_branch
    %8 = sbr.rel target = $region3
  $region8: #{tpu_custom_call.1} parent=0 // loop_exit
    _

</llo_original>
